<compile_context>
chip_gen: v5e
topology: v5e:2x2
jax: 0.10.0
libtpu: 0.0.40
codegen_flags: <defaults>
</compile_context>

<pallas_src>
import functools

import jax
import jax.numpy as jnp
from jax.experimental import pallas as pl
from jax.experimental.pallas import tpu as pltpu


def _round_up(n, m):
    return ((n + m - 1) // m) * m


def _default_config():
    """(tile_b, fuse_latent) tuned per TPU generation; safe fallbacks otherwise."""
    try:
        kind = jax.devices()[0].device_kind.lower()
    except Exception:
        return 1024, True
    is_v5e = ("v5 lite" in kind) or ("v5e" in kind) or ("v5litepod" in kind)
    if is_v5e:
        # 4x128^2 MXU: the fused 256-wide matmul costs the same passes as the two 32-wide
        # ones, and very large tiles push the single-vst f32 store path; keep 512 / unfused.
        # TODO(synk): if staying unfused on v5e long-term, lane-pad latent_dim 32->128.
        return 512, False
    return 1024, True


def _ae_kernel(x_ref, *refs, fused: bool):
    """One batch tile of the autoencoder forward pass (eval mode)."""
    out_ref = refs[-1]
    bf16 = jnp.bfloat16

    # f32 activations come straight from HBM; cast to bf16 on the VPU (it has slack).
    x = x_ref[...].astype(bf16)                                  # (tile_b, D)

    # ---- encoder: Linear(D -> H) + ReLU ----
    w1_ref, b1_ref = refs[0], refs[1]
    h1 = jnp.dot(x, w1_ref[...], preferred_element_type=jnp.float32) + b1_ref[...]
    h1 = jnp.maximum(h1, 0.0)
    # TODO(synk): training-mode dropout (pltpu.prng_random_bits mask) not implemented; eval = identity.

    if fused:
        # Eval-mode algebra: (h1 @ w2 + b2) @ w3 + b3 == h1 @ (w2 @ w3) + (b2 @ w3 + b3).
        w23_ref, b23_ref, w4_ref, b4_ref = refs[2], refs[3], refs[4], refs[5]
        h2 = jnp.dot(h1.astype(bf16), w23_ref[...],
                     preferred_element_type=jnp.float32) + b23_ref[...]
    else:
        w2_ref, b2_ref, w3_ref, b3_ref, w4_ref, b4_ref = refs[2:8]
        z = jnp.dot(h1.astype(bf16), w2_ref[...],
                    preferred_element_type=jnp.float32) + b2_ref[...]
        h2 = jnp.dot(z.astype(bf16), w3_ref[...],
                     preferred_element_type=jnp.float32) + b3_ref[...]

    # ---- decoder tail: ReLU + Linear(H -> D) + Sigmoid ----
    h2 = jnp.maximum(h2, 0.0)
    logits = jnp.dot(h2.astype(bf16), w4_ref[...],
                     preferred_element_type=jnp.float32) + b4_ref[...]

    # Sigmoid: exp on the EUP, approx reciprocal also on the EUP slot (no VPU divide).
    e = jnp.exp(-logits)
    out_ref[...] = pl.reciprocal(1.0 + e, approx=True).astype(out_ref.dtype)


@functools.partial(jax.jit, static_argnames=("tile_b", "fuse_latent", "out_dtype"))
def autoencoder_forward(x, params, tile_b=1024, fuse_latent=True,
                        out_dtype=jnp.bfloat16):
    (w1, b1, w2, b2, w3, b3, w4, b4) = params
    B, D = x.shape
    H = w1.shape[1]
    L = w2.shape[1]

    bf16 = jnp.bfloat16

    # Batch tile: big enough to amortise per-grid-step overhead, never larger than
    # the 8-row-aligned batch (so tiny batches stay a single tile).
    tile_b = max(8, min(tile_b, _round_up(B, 8)))
    grid = (pl.cdiv(B, tile_b),)   # ragged last tile: Pallas masks OOB output rows

    # bf16 matmul operands on the MXU; biases stay f32 (added to the f32 accumulator).
    w1b, w4b = w1.astype(bf16), w4.astype(bf16)
    if fuse_latent:
        w23 = jnp.dot(w2, w3, preferred_element_type=jnp.float32).astype(bf16)
        b23 = jnp.dot(b2, w3, preferred_element_type=jnp.float32) + b3
        weight_args = (w1b, b1, w23, b23, w4b, b4)
        flops = 2 * B * (D * H + H * H + H * D)
    else:
        weight_args = (w1b, b1, w2.astype(bf16), b2, w3.astype(bf16), b3, w4b, b4)
        flops = 2 * B * (D * H + H * L + L * H + H * D)

    def const_spec(a):
        shape = a.shape
        # Constant index_map -> stays VMEM-resident across all grid iterations.
        return pl.BlockSpec(shape, lambda i: (0,) * len(shape))

    in_specs = ([pl.BlockSpec((tile_b, D), lambda i: (i, 0))]      # x: tiled over batch
                + [const_spec(a) for a in weight_args])

    bytes_accessed = (
        B * D * x.dtype.itemsize                                     # x read (f32, once)
        + sum(a.size * a.dtype.itemsize for a in weight_args)        # weights/biases
        + B * D * jnp.dtype(out_dtype).itemsize                      # bf16 writeback
    )

    out = pl.pallas_call(
        functools.partial(_ae_kernel, fused=fuse_latent),
        out_shape=jax.ShapeDtypeStruct((B, D), out_dtype),
        grid=grid,
        in_specs=in_specs,
        out_specs=pl.BlockSpec((tile_b, D), lambda i: (i, 0)),
        compiler_params=pltpu.CompilerParams(
            dimension_semantics=("parallel",),   # batch axis: megacore-shardable
        ),
        cost_estimate=pl.CostEstimate(
            flops=flops,
            transcendentals=2 * B * D,           # exp + approx reciprocal per element
            bytes_accessed=bytes_accessed,
        ),
    )(x, *weight_args)

    return out


def init_params(key, input_dim, hidden_dim, latent_dim):
    """Deterministic init mirroring nn.Linear shapes (stored transposed: (in, out))."""
    keys = jax.random.split(key, 8)

    def linear(kw, kb, fan_in, fan_out):
        bound = 1.0 / jnp.sqrt(fan_in)
        w = jax.random.uniform(kw, (fan_in, fan_out), jnp.float32, -bound, bound)
        b = jax.random.uniform(kb, (1, fan_out), jnp.float32, -bound, bound)
        return w, b

    w1, b1 = linear(keys[0], keys[1], input_dim, hidden_dim)
    w2, b2 = linear(keys[2], keys[3], hidden_dim, latent_dim)
    w3, b3 = linear(keys[4], keys[5], latent_dim, hidden_dim)
    w4, b4 = linear(keys[6], keys[7], hidden_dim, input_dim)
    return (w1, b1, w2, b2, w3, b3, w4, b4)


def reference_forward(x, params):
    """Pure-JAX reference (unfused) with the same bf16-operand / f32-accumulate recipe."""
    (w1, b1, w2, b2, w3, b3, w4, b4) = params
    bf16, f32 = jnp.bfloat16, jnp.float32
    h1 = jnp.maximum(
        jnp.dot(x.astype(bf16), w1.astype(bf16), preferred_element_type=f32) + b1, 0.0)
    z = jnp.dot(h1.astype(bf16), w2.astype(bf16), preferred_element_type=f32) + b2
    h2 = jnp.maximum(
        jnp.dot(z.astype(bf16), w3.astype(bf16), preferred_element_type=f32) + b3, 0.0)
    logits = jnp.dot(h2.astype(bf16), w4.astype(bf16), preferred_element_type=f32) + b4
    return jax.nn.sigmoid(logits)


if __name__ == "__main__":
    input_dim, hidden_dim, latent_dim = 128, 256, 32
    batch = 8

    key = jax.random.PRNGKey(0)
    kx, kp = jax.random.split(key)
    x = jax.random.normal(kx, (batch, input_dim), dtype=jnp.float32)
    params = init_params(kp, input_dim, hidden_dim, latent_dim)

    tile_b, fuse_latent = _default_config()
    out = autoencoder_forward(x, params, tile_b=tile_b, fuse_latent=fuse_latent)
    out = jax.block_until_ready(out)

    ref = reference_forward(x, params)
    assert out.shape == (batch, input_dim)
    # bf16 output quantisation (~2e-3 on [0,1]) + fusion rounding + approx reciprocal.
    err = jnp.max(jnp.abs(out.astype(jnp.float32) - ref))
    assert jnp.allclose(out.astype(jnp.float32), ref, atol=1e-2, rtol=1e-2), float(err)

    print("KERNEL_OK")
</pallas_src>

<mosaic_0001>
module attributes {stable_mosaic.version = 11 : i64} {
  func.func @_ae_kernel(%arg0: i32, %arg1: memref<8x128xf32, #tpu.memory_space<vmem>>, %arg2: memref<128x256xbf16, #tpu.memory_space<vmem>>, %arg3: memref<1x256xf32, #tpu.memory_space<vmem>>, %arg4: memref<256x256xbf16, #tpu.memory_space<vmem>>, %arg5: memref<1x256xf32, #tpu.memory_space<vmem>>, %arg6: memref<256x128xbf16, #tpu.memory_space<vmem>>, %arg7: memref<1x128xf32, #tpu.memory_space<vmem>>, %arg8: memref<8x128xbf16, #tpu.memory_space<vmem>>) attributes {dimension_semantics = [#tpu.dimension_semantics<parallel>], iteration_bounds = array<i64: 1>, scalar_prefetch = 0 : i64, scratch_operands = 0 : i64, tpu.core_type = #tpu.core_type<tc>, window_params = [{transform_indices = @transform_0, window_bounds = array<i64: 8, 128>}, {pipeline_mode = #tpu.pipeline_mode<synchronous>, transform_indices = @transform_1, window_bounds = array<i64: 128, 256>}, {pipeline_mode = #tpu.pipeline_mode<synchronous>, transform_indices = @transform_2, window_bounds = array<i64: 1, 256>}, {pipeline_mode = #tpu.pipeline_mode<synchronous>, transform_indices = @transform_3, window_bounds = array<i64: 256, 256>}, {pipeline_mode = #tpu.pipeline_mode<synchronous>, transform_indices = @transform_4, window_bounds = array<i64: 1, 256>}, {pipeline_mode = #tpu.pipeline_mode<synchronous>, transform_indices = @transform_5, window_bounds = array<i64: 256, 128>}, {pipeline_mode = #tpu.pipeline_mode<synchronous>, transform_indices = @transform_6, window_bounds = array<i64: 1, 128>}, {transform_indices = @transform_7, window_bounds = array<i64: 8, 128>}]} {
    %c0 = arith.constant 0 : index
    %c0_0 = arith.constant 0 : index
    %0 = vector.load %arg1[%c0, %c0_0] : memref<8x128xf32, #tpu.memory_space<vmem>>, vector<8x128xf32>
    %1 = arith.truncf %0 : vector<8x128xf32> to vector<8x128xbf16>
    %c0_1 = arith.constant 0 : index
    %c0_2 = arith.constant 0 : index
    %2 = vector.load %arg2[%c0_1, %c0_2] : memref<128x256xbf16, #tpu.memory_space<vmem>>, vector<128x256xbf16>
    %cst = arith.constant dense<0.000000e+00> : vector<8x256xf32>
    %3 = tpu.matmul %1, %2, %cst {dimension_numbers = #tpu.dot_dimension_numbers<[1], [0], [0], [1], [0, 0, 1, 1], [], []>} : vector<8x128xbf16>, vector<128x256xbf16>, vector<8x256xf32> -> vector<8x256xf32>
    %c0_3 = arith.constant 0 : index
    %c0_4 = arith.constant 0 : index
    %4 = vector.load %arg3[%c0_3, %c0_4] : memref<1x256xf32, #tpu.memory_space<vmem>>, vector<1x256xf32>
    %5 = vector.broadcast %4 : vector<1x256xf32> to vector<8x256xf32>
    %6 = arith.addf %3, %5 : vector<8x256xf32>
    %cst_5 = arith.constant 0.000000e+00 : f32
    %7 = vector.broadcast %cst_5 : f32 to vector<8x256xf32>
    %8 = arith.maximumf %6, %7 : vector<8x256xf32>
    %9 = arith.truncf %8 : vector<8x256xf32> to vector<8x256xbf16>
    %c0_6 = arith.constant 0 : index
    %c0_7 = arith.constant 0 : index
    %10 = vector.load %arg4[%c0_6, %c0_7] : memref<256x256xbf16, #tpu.memory_space<vmem>>, vector<256x256xbf16>
    %cst_8 = arith.constant dense<0.000000e+00> : vector<8x256xf32>
    %11 = tpu.matmul %9, %10, %cst_8 {dimension_numbers = #tpu.dot_dimension_numbers<[1], [0], [0], [1], [0, 0, 1, 1], [], []>} : vector<8x256xbf16>, vector<256x256xbf16>, vector<8x256xf32> -> vector<8x256xf32>
    %c0_9 = arith.constant 0 : index
    %c0_10 = arith.constant 0 : index
    %12 = vector.load %arg5[%c0_9, %c0_10] : memref<1x256xf32, #tpu.memory_space<vmem>>, vector<1x256xf32>
    %13 = vector.broadcast %12 : vector<1x256xf32> to vector<8x256xf32>
    %14 = arith.addf %11, %13 : vector<8x256xf32>
    %cst_11 = arith.constant 0.000000e+00 : f32
    %15 = vector.broadcast %cst_11 : f32 to vector<8x256xf32>
    %16 = arith.maximumf %14, %15 : vector<8x256xf32>
    %17 = arith.truncf %16 : vector<8x256xf32> to vector<8x256xbf16>
    %c0_12 = arith.constant 0 : index
    %c0_13 = arith.constant 0 : index
    %18 = vector.load %arg6[%c0_12, %c0_13] : memref<256x128xbf16, #tpu.memory_space<vmem>>, vector<256x128xbf16>
    %cst_14 = arith.constant dense<0.000000e+00> : vector<8x128xf32>
    %19 = tpu.matmul %17, %18, %cst_14 {dimension_numbers = #tpu.dot_dimension_numbers<[1], [0], [0], [1], [0, 0, 1, 1], [], []>} : vector<8x256xbf16>, vector<256x128xbf16>, vector<8x128xf32> -> vector<8x128xf32>
    %c0_15 = arith.constant 0 : index
    %c0_16 = arith.constant 0 : index
    %20 = vector.load %arg7[%c0_15, %c0_16] : memref<1x128xf32, #tpu.memory_space<vmem>>, vector<1x128xf32>
    %21 = vector.broadcast %20 : vector<1x128xf32> to vector<8x128xf32>
    %22 = arith.addf %19, %21 : vector<8x128xf32>
    %cst_17 = arith.constant 0.000000e+00 : f32
    %23 = vector.broadcast %cst_17 : f32 to vector<8x128xf32>
    %24 = arith.subf %23, %22 : vector<8x128xf32>
    %25 = math.exp %24 : vector<8x128xf32>
    %cst_18 = arith.constant 1.000000e+00 : f32
    %26 = vector.broadcast %cst_18 : f32 to vector<8x128xf32>
    %27 = arith.addf %26, %25 : vector<8x128xf32>
    %28 = tpu.reciprocal %27 {approx = true} : vector<8x128xf32> -> vector<8x128xf32>
    %29 = arith.truncf %28 : vector<8x128xf32> to vector<8x128xbf16>
    %c0_19 = arith.constant 0 : index
    %c0_20 = arith.constant 0 : index
    %30 = vector.load %arg8[%c0_19, %c0_20] : memref<8x128xbf16, #tpu.memory_space<vmem>>, vector<8x128xbf16>
    tpu.vector_store %arg8[%c0_19, %c0_20], %29 {strides = array<i32>} : memref<8x128xbf16, #tpu.memory_space<vmem>>, vector<8x128xbf16>,
    return
  }
  func.func @transform_0(%arg0: i32) -> (i32, i32) {
    %c0_i32 = arith.constant 0 : i32
    %c0_i32_0 = arith.constant 0 : i32
    return %arg0, %c0_i32 : i32, i32
  }
  func.func @transform_1(%arg0: i32) -> (i32, i32) {
    %c0_i32 = arith.constant 0 : i32
    %c0_i32_0 = arith.constant 0 : i32
    %c0_i32_1 = arith.constant 0 : i32
    return %c0_i32, %c0_i32_0 : i32, i32
  }
  func.func @transform_2(%arg0: i32) -> (i32, i32) {
    %c0_i32 = arith.constant 0 : i32
    %c0_i32_0 = arith.constant 0 : i32
    %c0_i32_1 = arith.constant 0 : i32
    return %c0_i32, %c0_i32_0 : i32, i32
  }
  func.func @transform_3(%arg0: i32) -> (i32, i32) {
    %c0_i32 = arith.constant 0 : i32
    %c0_i32_0 = arith.constant 0 : i32
    %c0_i32_1 = arith.constant 0 : i32
    return %c0_i32, %c0_i32_0 : i32, i32
  }
  func.func @transform_4(%arg0: i32) -> (i32, i32) {
    %c0_i32 = arith.constant 0 : i32
    %c0_i32_0 = arith.constant 0 : i32
    %c0_i32_1 = arith.constant 0 : i32
    return %c0_i32, %c0_i32_0 : i32, i32
  }
  func.func @transform_5(%arg0: i32) -> (i32, i32) {
    %c0_i32 = arith.constant 0 : i32
    %c0_i32_0 = arith.constant 0 : i32
    %c0_i32_1 = arith.constant 0 : i32
    return %c0_i32, %c0_i32_0 : i32, i32
  }
  func.func @transform_6(%arg0: i32) -> (i32, i32) {
    %c0_i32 = arith.constant 0 : i32
    %c0_i32_0 = arith.constant 0 : i32
    %c0_i32_1 = arith.constant 0 : i32
    return %c0_i32, %c0_i32_0 : i32, i32
  }
  func.func @transform_7(%arg0: i32) -> (i32, i32) {
    %c0_i32 = arith.constant 0 : i32
    %c0_i32_0 = arith.constant 0 : i32
    return %arg0, %c0_i32 : i32, i32
  }
}

</mosaic_0001>

<llo_original>
// kernel: autoencoder_forward.1
$region0: #{autoencoder_forward.1}
  #allocation0 [shape = 'u32[]', space=smem, size = 0x4, offset = 0x4, fixed_abs, tag = 'smem constant byte address 0x4 - core index']
  #allocation1 [shape = 'u32[72,128]{1,0:T(1,128)}', space=vmem, size = 0x9000, scoped, tag = 'internal scratch']
  %s0 = inlined_call_operand.vmem [shape: f32[8,128], index: 0, kind: input, shape index: {}]
  %s1 = inlined_call_operand.vmem [shape: bf16[128,256], index: 1, kind: input, shape index: {}]
  %s2 = inlined_call_operand.vmem [shape: f32[1,256], index: 2, kind: input, shape index: {}]
  %s3 = inlined_call_operand.vmem [shape: bf16[256,256], index: 3, kind: input, shape index: {}]
  %s4 = inlined_call_operand.vmem [shape: f32[1,256], index: 4, kind: input, shape index: {}]
  %s5 = inlined_call_operand.vmem [shape: bf16[256,128], index: 5, kind: input, shape index: {}]
  %s6 = inlined_call_operand.vmem [shape: f32[1,128], index: 6, kind: input, shape index: {}]
  %s7 = inlined_call_operand.hbm [shape: bf16[8,128], index: 7, kind: output, shape index: {}]
  %s8 = sld [smem:[#allocation0]]
  $region38: #{autoencoder_forward.1} parent=0
    _
  %s10 = ssub.s32 1, %s8
  %s11 = scalar_select 0, %s10, %s8
  $region1: #{autoencoder_forward.1} parent=0
    #allocation2 [shape = 'u8[2048]{0}', space=vmem, size = 0x800, scoped, tag = 'output window, operand 0, single buffered']
    #allocation3 [shape = 's32[1]{0}', space=sflag, size = 0x4, scoped, tag = 'scoped memory for autoencoder_forward.1']
    %12 = vsyncpa [#allocation3], 0
    // Predicated region
    $region2: #{autoencoder_forward.1} parent=1 // pred_check
      _
    $region3: #{autoencoder_forward.1} parent=1 // pred_check_branch
      %14 = sbr.rel (0) target = $region5
    $region4: #{autoencoder_forward.1} parent=1 // pred_region
      _
    $region5: #{autoencoder_forward.1} parent=1 // pred_fallthru
      _
    // Predicated region
    $region6: #{autoencoder_forward.1} parent=1 // pred_check
      _
    $region7: #{autoencoder_forward.1} parent=1 // pred_check_branch
      %16 = sbr.rel (0) target = $region9
    $region8: #{autoencoder_forward.1} parent=1 // pred_region
      _
    $region9: #{autoencoder_forward.1} parent=1 // pred_fallthru
      _
    // Predicated region
    $region10: #{autoencoder_forward.1} parent=1 // pred_check
      _
    $region11: #{autoencoder_forward.1} parent=1 // pred_check_branch
      %18 = sbr.rel (0) target = $region13
    $region12: #{autoencoder_forward.1} parent=1 // pred_region
      _
    $region13: #{autoencoder_forward.1} parent=1 // pred_fallthru
      _
    // Predicated region
    $region14: #{autoencoder_forward.1} parent=1 // pred_check
      _
    $region15: #{autoencoder_forward.1} parent=1 // pred_check_branch
      %20 = sbr.rel (0) target = $region17
    $region16: #{autoencoder_forward.1} parent=1 // pred_region
      _
    $region17: #{autoencoder_forward.1} parent=1 // pred_fallthru
      _
    // Predicated region
    $region18: #{autoencoder_forward.1} parent=1 // pred_check
      _
    $region19: #{autoencoder_forward.1} parent=1 // pred_check_branch
      %22 = sbr.rel (0) target = $region21
    $region20: #{autoencoder_forward.1} parent=1 // pred_region
      _
    $region21: #{autoencoder_forward.1} parent=1 // pred_fallthru
      _
    // Predicated region
    $region22: #{autoencoder_forward.1} parent=1 // pred_check
      _
    $region23: #{autoencoder_forward.1} parent=1 // pred_check_branch
      %24 = sbr.rel (0) target = $region25
    $region24: #{autoencoder_forward.1} parent=1 // pred_region
      _
    $region25: #{autoencoder_forward.1} parent=1 // pred_fallthru
      _
    // Predicated region
    $region26: #{autoencoder_forward.1} parent=1 // pred_check
      _
    $region27: #{autoencoder_forward.1} parent=1 // pred_check_branch
      %26 = sbr.rel (0) target = $region29
    $region28: #{autoencoder_forward.1} parent=1 // pred_region
      _
    $region29: #{autoencoder_forward.1} parent=1 // pred_fallthru
      _
    %v27 = vld [vmem:[%s0] sm:$0xff]
    %v28 = vpack.c.bf16 %v27, %v27
    %v29 = vld [vmem:[%s1] sm:$0xff]
    %v30 = vld [vmem:[%s1 + $0x8] sm:$0xff]
    %v31 = vld [vmem:[%s1 + $0x10] sm:$0xff]
    %v32 = vld [vmem:[%s1 + $0x18] sm:$0xff]
    %v33 = vld [vmem:[%s1 + $0x20] sm:$0xff]
    %v34 = vld [vmem:[%s1 + $0x28] sm:$0xff]
    %v35 = vld [vmem:[%s1 + $0x30] sm:$0xff]
    %v36 = vld [vmem:[%s1 + $0x38] sm:$0xff]
    %v37 = vld [vmem:[%s1 + $0x40] sm:$0xff]
    %v38 = vld [vmem:[%s1 + $0x48] sm:$0xff]
    %v39 = vld [vmem:[%s1 + $0x50] sm:$0xff]
    %v40 = vld [vmem:[%s1 + $0x58] sm:$0xff]
    %v41 = vld [vmem:[%s1 + $0x60] sm:$0xff]
    %v42 = vld [vmem:[%s1 + $0x68] sm:$0xff]
    %v43 = vld [vmem:[%s1 + $0x70] sm:$0xff]
    %v44 = vld [vmem:[%s1 + $0x78] sm:$0xff]
    %v45 = vld [vmem:[%s2] sm:$0x3]
    %v47 = vperm.slane %v45, 0
    %v48 = vperm.slane %v45, 1
    %v67 = vunpack.c.l.b16 %v29
    %v68 = vunpack.c.h.b16 %v29
    %v69 = vunpack.c.l.b16 %v30
    %v70 = vunpack.c.h.b16 %v30
    %v71 = vunpack.c.l.b16 %v31
    %v72 = vunpack.c.h.b16 %v31
    %v73 = vunpack.c.l.b16 %v32
    %v74 = vunpack.c.h.b16 %v32
    %v75 = vunpack.c.l.b16 %v33
    %v76 = vunpack.c.h.b16 %v33
    %v77 = vunpack.c.l.b16 %v34
    %v78 = vunpack.c.h.b16 %v34
    %v79 = vunpack.c.l.b16 %v35
    %v80 = vunpack.c.h.b16 %v35
    %v81 = vunpack.c.l.b16 %v36
    %v82 = vunpack.c.h.b16 %v36
    %v83 = vunpack.c.l.b16 %v37
    %v84 = vunpack.c.h.b16 %v37
    %v85 = vunpack.c.l.b16 %v38
    %v86 = vunpack.c.h.b16 %v38
    %v87 = vunpack.c.l.b16 %v39
    %v88 = vunpack.c.h.b16 %v39
    %v89 = vunpack.c.l.b16 %v40
    %v90 = vunpack.c.h.b16 %v40
    %v91 = vunpack.c.l.b16 %v41
    %v92 = vunpack.c.h.b16 %v41
    %v93 = vunpack.c.l.b16 %v42
    %v94 = vunpack.c.h.b16 %v42
    %v95 = vunpack.c.l.b16 %v43
    %v96 = vunpack.c.h.b16 %v43
    %v97 = vunpack.c.l.b16 %v44
    %v98 = vunpack.c.h.b16 %v44
    %v99 = vpack.c.b16 %v69, %v67
    %v100 = vpack.c.b16 %v70, %v68
    %v101 = vpack.c.b16 %v73, %v71
    %v102 = vpack.c.b16 %v74, %v72
    %v103 = vpack.c.b16 %v77, %v75
    %v104 = vpack.c.b16 %v78, %v76
    %v105 = vpack.c.b16 %v81, %v79
    %v106 = vpack.c.b16 %v82, %v80
    %v107 = vpack.c.b16 %v85, %v83
    %v108 = vpack.c.b16 %v86, %v84
    %v109 = vpack.c.b16 %v89, %v87
    %v110 = vpack.c.b16 %v90, %v88
    %v111 = vpack.c.b16 %v93, %v91
    %v112 = vpack.c.b16 %v94, %v92
    %v113 = vpack.c.b16 %v97, %v95
    %v114 = vpack.c.b16 %v98, %v96
    %131 = vmatpush.bf16.msra.mxu0 %v113
    %132 = vmatpush.bf16.msra.mxu0 %v111
    %133 = vmatpush.bf16.msra.mxu0 %v109
    %134 = vmatpush.bf16.msra.mxu0 %v107
    %135 = vmatpush.bf16.msra.mxu0 %v105
    %136 = vmatpush.bf16.msra.mxu0 %v103
    %137 = vmatpush.bf16.msra.mxu0 %v101
    %138 = vmatpush.bf16.msra.mxu0 %v99
    %139 = vmatmul.bf16.gmra.mxu0 %v28
    %v140 = vpop.f32.mrf.mxu0
    %v141 = vadd.f32 %v47, %v140
    %v142 = vpop.f32.mrf.mxu0
    %143 = vdwg.mxu0
    %144 = vmatpush.bf16.msra.mxu0 %v114
    %145 = vmatpush.bf16.msra.mxu0 %v112
    %146 = vmatpush.bf16.msra.mxu0 %v110
    %147 = vmatpush.bf16.msra.mxu0 %v108
    %148 = vmatpush.bf16.msra.mxu0 %v106
    %149 = vmatpush.bf16.msra.mxu0 %v104
    %150 = vmatpush.bf16.msra.mxu0 %v102
    %151 = vmatpush.bf16.msra.mxu0 %v100
    %152 = vmatmul.bf16.gmra.mxu0 %v28
    %v153 = vpop.f32.mrf.mxu0
    %v154 = vadd.f32 %v48, %v153
    %v155 = vpop.f32.mrf.mxu0
    %156 = vdwg.mxu0
    %v157 = vmax.f32 %v141, 0.0
    %v158 = vmax.f32 %v154, 0.0
    %v159 = vpack.c.bf16 %v157, %v157
    %v160 = vpack.c.bf16 %v158, %v158
    %v161 = vld [vmem:[%s3] sm:$0xff]
    %v162 = vld [vmem:[%s3 + $0x8] sm:$0xff]
    %v163 = vld [vmem:[%s3 + $0x10] sm:$0xff]
    %v164 = vld [vmem:[%s3 + $0x18] sm:$0xff]
    %v165 = vld [vmem:[%s3 + $0x20] sm:$0xff]
    %v166 = vld [vmem:[%s3 + $0x28] sm:$0xff]
    %v167 = vld [vmem:[%s3 + $0x30] sm:$0xff]
    %v168 = vld [vmem:[%s3 + $0x38] sm:$0xff]
    %v169 = vld [vmem:[%s3 + $0x40] sm:$0xff]
    %v170 = vld [vmem:[%s3 + $0x48] sm:$0xff]
    %v171 = vld [vmem:[%s3 + $0x50] sm:$0xff]
    %v172 = vld [vmem:[%s3 + $0x58] sm:$0xff]
    %v173 = vld [vmem:[%s3 + $0x60] sm:$0xff]
    %v174 = vld [vmem:[%s3 + $0x68] sm:$0xff]
    %v175 = vld [vmem:[%s3 + $0x70] sm:$0xff]
    %v176 = vld [vmem:[%s3 + $0x78] sm:$0xff]
    %v177 = vld [vmem:[%s3 + $0x80] sm:$0xff]
    %v178 = vld [vmem:[%s3 + $0x88] sm:$0xff]
    %v179 = vld [vmem:[%s3 + $0x90] sm:$0xff]
    %v180 = vld [vmem:[%s3 + $0x98] sm:$0xff]
    %v181 = vld [vmem:[%s3 + $0xa0] sm:$0xff]
    %v182 = vld [vmem:[%s3 + $0xa8] sm:$0xff]
    %v183 = vld [vmem:[%s3 + $0xb0] sm:$0xff]
    %v184 = vld [vmem:[%s3 + $0xb8] sm:$0xff]
    %v185 = vld [vmem:[%s3 + $0xc0] sm:$0xff]
    %v186 = vld [vmem:[%s3 + $0xc8] sm:$0xff]
    %v187 = vld [vmem:[%s3 + $0xd0] sm:$0xff]
    %v188 = vld [vmem:[%s3 + $0xd8] sm:$0xff]
    %v189 = vld [vmem:[%s3 + $0xe0] sm:$0xff]
    %v190 = vld [vmem:[%s3 + $0xe8] sm:$0xff]
    %v191 = vld [vmem:[%s3 + $0xf0] sm:$0xff]
    %v192 = vld [vmem:[%s3 + $0xf8] sm:$0xff]
    %v193 = vld [vmem:[%s4] sm:$0x3]
    %v195 = vperm.slane %v193, 0
    %v196 = vperm.slane %v193, 1
    %v231 = vunpack.c.l.b16 %v161
    %v232 = vunpack.c.h.b16 %v161
    %v233 = vunpack.c.l.b16 %v162
    %v234 = vunpack.c.h.b16 %v162
    %v235 = vunpack.c.l.b16 %v163
    %v236 = vunpack.c.h.b16 %v163
    %v237 = vunpack.c.l.b16 %v164
    %v238 = vunpack.c.h.b16 %v164
    %v239 = vunpack.c.l.b16 %v165
    %v240 = vunpack.c.h.b16 %v165
    %v241 = vunpack.c.l.b16 %v166
    %v242 = vunpack.c.h.b16 %v166
    %v243 = vunpack.c.l.b16 %v167
    %v244 = vunpack.c.h.b16 %v167
    %v245 = vunpack.c.l.b16 %v168
    %v246 = vunpack.c.h.b16 %v168
    %v247 = vunpack.c.l.b16 %v169
    %v248 = vunpack.c.h.b16 %v169
    %v249 = vunpack.c.l.b16 %v170
    %v250 = vunpack.c.h.b16 %v170
    %v251 = vunpack.c.l.b16 %v171
    %v252 = vunpack.c.h.b16 %v171
    %v253 = vunpack.c.l.b16 %v172
    %v254 = vunpack.c.h.b16 %v172
    %v255 = vunpack.c.l.b16 %v173
    %v256 = vunpack.c.h.b16 %v173
    %v257 = vunpack.c.l.b16 %v174
    %v258 = vunpack.c.h.b16 %v174
    %v259 = vunpack.c.l.b16 %v175
    %v260 = vunpack.c.h.b16 %v175
    %v261 = vunpack.c.l.b16 %v176
    %v262 = vunpack.c.h.b16 %v176
    %v263 = vunpack.c.l.b16 %v177
    %v264 = vunpack.c.h.b16 %v177
    %v265 = vunpack.c.l.b16 %v178
    %v266 = vunpack.c.h.b16 %v178
    %v267 = vunpack.c.l.b16 %v179
    %v268 = vunpack.c.h.b16 %v179
    %v269 = vunpack.c.l.b16 %v180
    %v270 = vunpack.c.h.b16 %v180
    %v271 = vunpack.c.l.b16 %v181
    %v272 = vunpack.c.h.b16 %v181
    %v273 = vunpack.c.l.b16 %v182
    %v274 = vunpack.c.h.b16 %v182
    %v275 = vunpack.c.l.b16 %v183
    %v276 = vunpack.c.h.b16 %v183
    %v277 = vunpack.c.l.b16 %v184
    %v278 = vunpack.c.h.b16 %v184
    %v279 = vunpack.c.l.b16 %v185
    %v280 = vunpack.c.h.b16 %v185
    %v281 = vunpack.c.l.b16 %v186
    %v282 = vunpack.c.h.b16 %v186
    %v283 = vunpack.c.l.b16 %v187
    %v284 = vunpack.c.h.b16 %v187
    %v285 = vunpack.c.l.b16 %v188
    %v286 = vunpack.c.h.b16 %v188
    %v287 = vunpack.c.l.b16 %v189
    %v288 = vunpack.c.h.b16 %v189
    %v289 = vunpack.c.l.b16 %v190
    %v290 = vunpack.c.h.b16 %v190
    %v291 = vunpack.c.l.b16 %v191
    %v292 = vunpack.c.h.b16 %v191
    %v293 = vunpack.c.l.b16 %v192
    %v294 = vunpack.c.h.b16 %v192
    %v295 = vpack.c.b16 %v233, %v231
    %v296 = vpack.c.b16 %v234, %v232
    %v297 = vpack.c.b16 %v237, %v235
    %v298 = vpack.c.b16 %v238, %v236
    %v299 = vpack.c.b16 %v241, %v239
    %v300 = vpack.c.b16 %v242, %v240
    %v301 = vpack.c.b16 %v245, %v243
    %v302 = vpack.c.b16 %v246, %v244
    %v303 = vpack.c.b16 %v249, %v247
    %v304 = vpack.c.b16 %v250, %v248
    %v305 = vpack.c.b16 %v253, %v251
    %v306 = vpack.c.b16 %v254, %v252
    %v307 = vpack.c.b16 %v257, %v255
    %v308 = vpack.c.b16 %v258, %v256
    %v309 = vpack.c.b16 %v261, %v259
    %v310 = vpack.c.b16 %v262, %v260
    %v311 = vpack.c.b16 %v265, %v263
    %v312 = vpack.c.b16 %v266, %v264
    %v313 = vpack.c.b16 %v269, %v267
    %v314 = vpack.c.b16 %v270, %v268
    %v315 = vpack.c.b16 %v273, %v271
    %v316 = vpack.c.b16 %v274, %v272
    %v317 = vpack.c.b16 %v277, %v275
    %v318 = vpack.c.b16 %v278, %v276
    %v319 = vpack.c.b16 %v281, %v279
    %v320 = vpack.c.b16 %v282, %v280
    %v321 = vpack.c.b16 %v285, %v283
    %v322 = vpack.c.b16 %v286, %v284
    %v323 = vpack.c.b16 %v289, %v287
    %v324 = vpack.c.b16 %v290, %v288
    %v325 = vpack.c.b16 %v293, %v291
    %v326 = vpack.c.b16 %v294, %v292
    %359 = vmatpush.bf16.msra.mxu0 %v309
    %360 = vmatpush.bf16.msra.mxu0 %v307
    %361 = vmatpush.bf16.msra.mxu0 %v305
    %362 = vmatpush.bf16.msra.mxu0 %v303
    %363 = vmatpush.bf16.msra.mxu0 %v301
    %364 = vmatpush.bf16.msra.mxu0 %v299
    %365 = vmatpush.bf16.msra.mxu0 %v297
    %366 = vmatpush.bf16.msra.mxu0 %v295
    %367 = vmatmul.bf16.gmra.mxu0 %v159
    %v368 = vpop.f32.mrf.mxu0
    %v369 = vadd.f32 %v195, %v368
    %v370 = vpop.f32.mrf.mxu0
    %371 = vdwg.mxu0
    %372 = vmatpush.bf16.msra.mxu0 %v325
    %373 = vmatpush.bf16.msra.mxu0 %v323
    %374 = vmatpush.bf16.msra.mxu0 %v321
    %375 = vmatpush.bf16.msra.mxu0 %v319
    %376 = vmatpush.bf16.msra.mxu0 %v317
    %377 = vmatpush.bf16.msra.mxu0 %v315
    %378 = vmatpush.bf16.msra.mxu0 %v313
    %379 = vmatpush.bf16.msra.mxu0 %v311
    %380 = vmatmul.bf16.gmra.mxu0 %v160
    %v381 = vpop.f32.mrf.mxu0
    %v382 = vadd.f32 %v369, %v381
    %v383 = vpop.f32.mrf.mxu0
    %384 = vdwg.mxu0
    %385 = vmatpush.bf16.msra.mxu0 %v310
    %386 = vmatpush.bf16.msra.mxu0 %v308
    %387 = vmatpush.bf16.msra.mxu0 %v306
    %388 = vmatpush.bf16.msra.mxu0 %v304
    %389 = vmatpush.bf16.msra.mxu0 %v302
    %390 = vmatpush.bf16.msra.mxu0 %v300
    %391 = vmatpush.bf16.msra.mxu0 %v298
    %392 = vmatpush.bf16.msra.mxu0 %v296
    %393 = vmatmul.bf16.gmra.mxu0 %v159
    %v394 = vpop.f32.mrf.mxu0
    %v395 = vadd.f32 %v196, %v394
    %v396 = vpop.f32.mrf.mxu0
    %397 = vdwg.mxu0
    %398 = vmatpush.bf16.msra.mxu0 %v326
    %399 = vmatpush.bf16.msra.mxu0 %v324
    %400 = vmatpush.bf16.msra.mxu0 %v322
    %401 = vmatpush.bf16.msra.mxu0 %v320
    %402 = vmatpush.bf16.msra.mxu0 %v318
    %403 = vmatpush.bf16.msra.mxu0 %v316
    %404 = vmatpush.bf16.msra.mxu0 %v314
    %405 = vmatpush.bf16.msra.mxu0 %v312
    %406 = vmatmul.bf16.gmra.mxu0 %v160
    %v407 = vpop.f32.mrf.mxu0
    %v408 = vadd.f32 %v395, %v407
    %v409 = vpop.f32.mrf.mxu0
    %410 = vdwg.mxu0
    %v411 = vmax.f32 %v382, 0.0
    %v412 = vmax.f32 %v408, 0.0
    %v413 = vpack.c.bf16 %v411, %v411
    %v414 = vpack.c.bf16 %v412, %v412
    %v415 = vld [vmem:[%s5] sm:$0xf]
    %v416 = vld [vmem:[%s5 + $0x4] sm:$0xf]
    %v417 = vld [vmem:[%s5 + $0x8] sm:$0xf]
    %v418 = vld [vmem:[%s5 + $0xc] sm:$0xf]
    %v419 = vld [vmem:[%s5 + $0x10] sm:$0xf]
    %v420 = vld [vmem:[%s5 + $0x14] sm:$0xf]
    %v421 = vld [vmem:[%s5 + $0x18] sm:$0xf]
    %v422 = vld [vmem:[%s5 + $0x1c] sm:$0xf]
    %v423 = vld [vmem:[%s5 + $0x20] sm:$0xf]
    %v424 = vld [vmem:[%s5 + $0x24] sm:$0xf]
    %v425 = vld [vmem:[%s5 + $0x28] sm:$0xf]
    %v426 = vld [vmem:[%s5 + $0x2c] sm:$0xf]
    %v427 = vld [vmem:[%s5 + $0x30] sm:$0xf]
    %v428 = vld [vmem:[%s5 + $0x34] sm:$0xf]
    %v429 = vld [vmem:[%s5 + $0x38] sm:$0xf]
    %v430 = vld [vmem:[%s5 + $0x3c] sm:$0xf]
    %v431 = vld [vmem:[%s5 + $0x40] sm:$0xf]
    %v432 = vld [vmem:[%s5 + $0x44] sm:$0xf]
    %v433 = vld [vmem:[%s5 + $0x48] sm:$0xf]
    %v434 = vld [vmem:[%s5 + $0x4c] sm:$0xf]
    %v435 = vld [vmem:[%s5 + $0x50] sm:$0xf]
    %v436 = vld [vmem:[%s5 + $0x54] sm:$0xf]
    %v437 = vld [vmem:[%s5 + $0x58] sm:$0xf]
    %v438 = vld [vmem:[%s5 + $0x5c] sm:$0xf]
    %v439 = vld [vmem:[%s5 + $0x60] sm:$0xf]
    %v440 = vld [vmem:[%s5 + $0x64] sm:$0xf]
    %v441 = vld [vmem:[%s5 + $0x68] sm:$0xf]
    %v442 = vld [vmem:[%s5 + $0x6c] sm:$0xf]
    %v443 = vld [vmem:[%s5 + $0x70] sm:$0xf]
    %v444 = vld [vmem:[%s5 + $0x74] sm:$0xf]
    %v445 = vld [vmem:[%s5 + $0x78] sm:$0xf]
    %v446 = vld [vmem:[%s5 + $0x7c] sm:$0xf]
    %v447 = vld [vmem:[%s6] sm:$0x1]
    %v449 = vperm.slane %v447, 0
    %v483 = vunpack.c.l.b16 %v415
    %v484 = vunpack.c.l.b16 %v416
    %v485 = vunpack.c.l.b16 %v417
    %v486 = vunpack.c.l.b16 %v418
    %v487 = vunpack.c.l.b16 %v419
    %v488 = vunpack.c.l.b16 %v420
    %v489 = vunpack.c.l.b16 %v421
    %v490 = vunpack.c.l.b16 %v422
    %v491 = vunpack.c.l.b16 %v423
    %v492 = vunpack.c.l.b16 %v424
    %v493 = vunpack.c.l.b16 %v425
    %v494 = vunpack.c.l.b16 %v426
    %v495 = vunpack.c.l.b16 %v427
    %v496 = vunpack.c.l.b16 %v428
    %v497 = vunpack.c.l.b16 %v429
    %v498 = vunpack.c.l.b16 %v430
    %v499 = vunpack.c.l.b16 %v431
    %v500 = vunpack.c.l.b16 %v432
    %v501 = vunpack.c.l.b16 %v433
    %v502 = vunpack.c.l.b16 %v434
    %v503 = vunpack.c.l.b16 %v435
    %v504 = vunpack.c.l.b16 %v436
    %v505 = vunpack.c.l.b16 %v437
    %v506 = vunpack.c.l.b16 %v438
    %v507 = vunpack.c.l.b16 %v439
    %v508 = vunpack.c.l.b16 %v440
    %v509 = vunpack.c.l.b16 %v441
    %v510 = vunpack.c.l.b16 %v442
    %v511 = vunpack.c.l.b16 %v443
    %v512 = vunpack.c.l.b16 %v444
    %v513 = vunpack.c.l.b16 %v445
    %v514 = vunpack.c.l.b16 %v446
    %v515 = vpack.c.b16 %v484, %v483
    %v516 = vpack.c.b16 %v486, %v485
    %v517 = vpack.c.b16 %v488, %v487
    %v518 = vpack.c.b16 %v490, %v489
    %v519 = vpack.c.b16 %v492, %v491
    %v520 = vpack.c.b16 %v494, %v493
    %v521 = vpack.c.b16 %v496, %v495
    %v522 = vpack.c.b16 %v498, %v497
    %v523 = vpack.c.b16 %v500, %v499
    %v524 = vpack.c.b16 %v502, %v501
    %v525 = vpack.c.b16 %v504, %v503
    %v526 = vpack.c.b16 %v506, %v505
    %v527 = vpack.c.b16 %v508, %v507
    %v528 = vpack.c.b16 %v510, %v509
    %v529 = vpack.c.b16 %v512, %v511
    %v530 = vpack.c.b16 %v514, %v513
    %547 = vmatpush.bf16.msra.mxu0 %v522
    %548 = vmatpush.bf16.msra.mxu0 %v521
    %549 = vmatpush.bf16.msra.mxu0 %v520
    %550 = vmatpush.bf16.msra.mxu0 %v519
    %551 = vmatpush.bf16.msra.mxu0 %v518
    %552 = vmatpush.bf16.msra.mxu0 %v517
    %553 = vmatpush.bf16.msra.mxu0 %v516
    %554 = vmatpush.bf16.msra.mxu0 %v515
    %555 = vmatmul.bf16.gmra.mxu0 %v413
    %v556 = vpop.f32.mrf.mxu0
    %v557 = vadd.f32 %v449, %v556
    %v558 = vpop.f32.mrf.mxu0
    %559 = vdwg.mxu0
    %560 = vmatpush.bf16.msra.mxu0 %v530
    %561 = vmatpush.bf16.msra.mxu0 %v529
    %562 = vmatpush.bf16.msra.mxu0 %v528
    %563 = vmatpush.bf16.msra.mxu0 %v527
    %564 = vmatpush.bf16.msra.mxu0 %v526
    %565 = vmatpush.bf16.msra.mxu0 %v525
    %566 = vmatpush.bf16.msra.mxu0 %v524
    %567 = vmatpush.bf16.msra.mxu0 %v523
    %568 = vmatmul.bf16.gmra.mxu0 %v414
    %v569 = vpop.f32.mrf.mxu0
    %v570 = vadd.f32 %v557, %v569
    %v571 = vpop.f32.mrf.mxu0
    %572 = vdwg.mxu0
    %v573 = vsub.f32 0.0, %v570
    %v574 = vmul.f32 %v573, 1.442695
    %v575 = vpow.pop %v574
    %v576 = vadd.f32 %v575, 1.0
    %v577 = vrcp.pop %v576
    %v578 = vpack.c.bf16 %v577, %v577
    %579 = vst [vmem:[#allocation2] sm:$0xf] %v578
    // Predicated region
    $region30: #{autoencoder_forward.1} parent=1 // pred_check
      _
    $region31: #{autoencoder_forward.1} parent=1 // pred_check_branch
      %581 = sbr.rel (0) target = $region33
    $region32: #{autoencoder_forward.1} parent=1 // pred_region
      %583 = vsyncadd [#allocation3], 0
      %s585 = sshll.u32 [#allocation2], 4
      %s586 = int_to_ptr.vmem [resolvable:$true] %s585
      %s587 = sshll.u32 %s7, 4
      %s588 = int_to_ptr.hbm [resolvable:$true] %s587
      %590 = dma.vmem_to_hbm [thread:$0]  %s586, 64, %s588, [#allocation3]
    $region33: #{autoencoder_forward.1} parent=1 // pred_fallthru
      _
    // Predicated region
    $region34: #{autoencoder_forward.1} parent=1 // pred_check
      _
    $region35: #{autoencoder_forward.1} parent=1 // pred_check_branch
      %592 = sbr.rel (0) target = $region37
    $region36: #{autoencoder_forward.1} parent=1 // pred_region
      %594 = dma.done [#allocation3], 64
    $region37: #{autoencoder_forward.1} parent=1 // pred_fallthru
      _
    %595 = vsyncpa [#allocation3], 1

</llo_original>
